<compile_context>
chip_gen: v7x
topology: tpu7x:2x2x1
jax: 0.10.0
libtpu: 0.0.40
codegen_flags: <defaults>
</compile_context>

<pallas_src>
import jax
import jax.numpy as jnp
import numpy as np
from jax.experimental import pallas as pl
from jax.experimental.pallas import tpu as pltpu


def _make_update_kernel(tb, n_pad, n_true, lambda_rof, tau, has_halo, hb):
    lam_tau = float(lambda_rof) * float(tau)
    tau_f = float(tau)
    inv_denom = 1.0 / (1.0 + lam_tau)
    last_col = n_true - 1  # true last column (may differ from n_pad - 1)

    def compute(x_ref, obs_ref, y_ref, w_ref, out_ref, prev):
        x = x_ref[...].astype(jnp.float32)        # (tb, n_pad)
        obs = obs_ref[...].astype(jnp.float32)    # (tb, n_pad)
        a = y_ref[0].astype(jnp.float32) * w_ref[0].astype(jnp.float32)  # horizontal dual
        c = y_ref[1].astype(jnp.float32) * w_ref[1].astype(jnp.float32)  # vertical dual

        col = jax.lax.broadcasted_iota(jnp.int32, (tb, n_pad), 1)
        row = jax.lax.broadcasted_iota(jnp.int32, (tb, n_pad), 0)

        # Horizontal backward divergence: zero the true last column, backward
        # diff with zero fill.  The lane-roll wraps a zero column into lane 0
        # (padded cols are zero; unpadded case wraps the zeroed last column).
        b = jnp.where(col == last_col, 0.0, a)
        d_h = b - pltpu.roll(b, 1, axis=1)

        # Vertical backward divergence: zero the GLOBAL last row (last tile,
        # local row tb-1), backward diff along rows; row 0 of each tile uses
        # the 1-row halo `prev` (zeros on tile 0).  For the single-tile case
        # the sublane-roll wrap already brings in the zeroed last row.
        is_last_tile = pl.program_id(0) == pl.num_programs(0) - 1
        c_z = jnp.where(jnp.logical_and(row == tb - 1, is_last_tile), 0.0, c)
        c_up = pltpu.roll(c_z, 1, axis=0)
        if prev is not None:
            c_up = jnp.where(row == 0, prev, c_up)
        d_v = c_z - c_up

        div = d_h + d_v
        out = (x + tau_f * div + lam_tau * obs) * inv_denom
        out_ref[...] = out.astype(out_ref.dtype)

    if has_halo:
        def kernel(x_ref, obs_ref, y_ref, w_ref, yh_ref, wh_ref, out_ref):
            # Halo blocks are the hb-row slabs of y[1]/w[1] whose LAST row is
            # the row just above this tile; masked to zero on tile 0.
            prev = (yh_ref[pl.ds(hb - 1, 1), :].astype(jnp.float32)
                    * wh_ref[pl.ds(hb - 1, 1), :].astype(jnp.float32))   # (1, n_pad)
            prev = jnp.where(pl.program_id(0) == 0, 0.0, prev)
            compute(x_ref, obs_ref, y_ref, w_ref, out_ref, prev)
    else:
        def kernel(x_ref, obs_ref, y_ref, w_ref, out_ref):
            compute(x_ref, obs_ref, y_ref, w_ref, out_ref, None)

    return kernel


def _pick_row_tile(m, n_pad, itemsize, min_sublane, vmem_target_bytes):
    # Full per-row footprint: 7 block streams (x, obs, 2*y, 2*w, out) x 2
    # pipeline buffers x itemsize, plus ~8 full-tile f32 temporaries from the
    # mul/roll/where chain (a, c, b, c_z, c_up, d_h, d_v, out).
    per_row_bytes = n_pad * (14 * itemsize + 32)
    budget_rows = max(min_sublane, vmem_target_bytes // max(per_row_bytes, 1))
    # Prefer >= 2 grid steps so the "parallel" axis can shard across v7x's two
    # TensorCores (no effect on single-TC v5e/v6e).
    upper = m // 2 if m >= 2 * min_sublane else m
    cand = (min(budget_rows, upper) // min_sublane) * min_sublane
    while cand >= min_sublane:
        if m % cand == 0:
            return cand
        cand -= min_sublane
    return m  # awkward M: single full-extent row tile (block == full extent is legal)


def primal_weighted_update(x, y, img_obs, w, *, lambda_rof, tau, row_tile=None):
    """x, img_obs: (1, M, N); y, w: (2, M, N). Returns the updated x, shape (1, M, N)."""
    x = jnp.asarray(x)
    y = jnp.asarray(y)
    img_obs = jnp.asarray(img_obs)
    w = jnp.asarray(w)
    _, m, n = x.shape
    assert y.shape == (2, m, n) and w.shape == (2, m, n) and img_obs.shape == (1, m, n)
    # Degenerate 1-pixel axes follow the reference's overlapping .at[] semantics;
    # not supported here.
    assert m >= 2 and n >= 2

    # Lane-dense stores: pad ragged widths up to a multiple of 128.  Padded
    # columns stay zero through the whole update and are sliced off; the
    # horizontal mask still zeroes the TRUE last column (n - 1).
    n_pad = ((n + 127) // 128) * 128
    if n_pad != n:
        pad = ((0, 0), (0, 0), (0, n_pad - n))
        x_p, obs_p = jnp.pad(x, pad), jnp.pad(img_obs, pad)
        y_p, w_p = jnp.pad(y, pad), jnp.pad(w, pad)
    else:
        x_p, obs_p, y_p, w_p = x, img_obs, y, w

    itemsize = int(max(x.dtype.itemsize, y.dtype.itemsize,
                       w.dtype.itemsize, img_obs.dtype.itemsize))
    # Dtype-aware sublane multiple: 8 for 4-byte, 16 for bf16, 32 for int8/fp8.
    min_sublane = max(8, 32 // max(itemsize, 1))

    # Generation-aware VMEM accounting: explicit scoped-VMEM limit (removes the
    # v5e 16 MiB-default OOM mode) and a modest tile target — ~1-2 MiB blocks
    # already sit on the HBM-roofline plateau on every generation.
    try:
        vmem_cap = int(getattr(pltpu.get_tpu_info(), "vmem_capacity_bytes", 64 << 20))
    except Exception:  # pragma: no cover - conservative fallback off-TPU
        vmem_cap = 64 << 20
    vmem_limit = int(min((vmem_cap * 3) // 4, 96 << 20))   # 96 MiB on 128 MiB, 48 MiB on v7x
    vmem_target = min(vmem_limit, 32 << 20)

    if (row_tile is not None and m % row_tile == 0
            and (row_tile == m or row_tile % min_sublane == 0)):
        tb = int(row_tile)
    else:
        tb = _pick_row_tile(m, n_pad, itemsize, min_sublane, vmem_target)
    num_tiles = m // tb
    has_halo = num_tiles > 1
    hb = min_sublane  # halo block rows (aligned min-tile slab; we use its last row)

    kernel = _make_update_kernel(tb, n_pad, n, lambda_rof, tau, has_halo, hb)

    in_specs = [
        pl.BlockSpec((None, tb, n_pad), lambda i: (0, i, 0)),  # x       (leading dim squeezed)
        pl.BlockSpec((None, tb, n_pad), lambda i: (0, i, 0)),  # img_obs
        pl.BlockSpec((2, tb, n_pad), lambda i: (0, i, 0)),     # y  (both dual components)
        pl.BlockSpec((2, tb, n_pad), lambda i: (0, i, 0)),     # w
    ]
    args = [x_p, obs_p, y_p, w_p]
    if has_halo:
        # In-kernel halo: the hb-row block of y[1]/w[1] ending at row i*tb - 1
        # (clamped to block 0 for tile 0, where it is masked to zero).  Tiny
        # extra DMA per step, pipelined like everything else — no wrapper ops.
        blocks_per_tile = tb // hb
        halo_map = lambda i: (1, jnp.maximum(i * blocks_per_tile - 1, 0), 0)
        in_specs += [
            pl.BlockSpec((None, hb, n_pad), halo_map),         # y[1] halo slab
            pl.BlockSpec((None, hb, n_pad), halo_map),         # w[1] halo slab
        ]
        args += [y_p, w_p]

    elem_bytes = x.dtype.itemsize
    cost = pl.CostEstimate(
        flops=14 * m * n_pad,
        transcendentals=0,
        bytes_accessed=(2 * m * n_pad + m * n_pad + 4 * m * n_pad) * elem_bytes,
    )

    out = pl.pallas_call(
        kernel,
        out_shape=jax.ShapeDtypeStruct((1, m, n_pad), x.dtype),
        grid=(num_tiles,),
        in_specs=in_specs,
        out_specs=pl.BlockSpec((None, tb, n_pad), lambda i: (0, i, 0)),
        compiler_params=pltpu.CompilerParams(
            dimension_semantics=("parallel",),
            vmem_limit_bytes=vmem_limit,
        ),
        cost_estimate=cost,
    )(*args)

    if n_pad != n:
        out = out[:, :, :n]
    return out


def _reference(x, y, img_obs, w, lambda_rof, tau):
    """Pure-JAX mirror of the PyTorch forward semantics."""
    y_w = (w * y).astype(jnp.float32)
    _, m, n = x.shape
    d_h = jnp.zeros((1, m, n), jnp.float32)
    d_h = d_h.at[0, :, 0].set(y_w[0, :, 0])
    d_h = d_h.at[0, :, 1:-1].set(y_w[0, :, 1:-1] - y_w[0, :, :-2])
    d_h = d_h.at[0, :, -1].set(-y_w[0, :, -2])
    d_v = jnp.zeros((1, m, n), jnp.float32)
    d_v = d_v.at[0, 0, :].set(y_w[1, 0, :])
    d_v = d_v.at[0, 1:-1, :].set(y_w[1, 1:-1, :] - y_w[1, :-2, :])
    d_v = d_v.at[0, -1, :].set(-y_w[1, -2, :])
    div = d_h + d_v
    return (x + tau * div + lambda_rof * tau * img_obs) / (1.0 + lambda_rof * tau)


def _check(out, ref, tag):
    out = np.asarray(out)
    ref = np.asarray(ref)
    assert np.allclose(out, ref, rtol=1e-5, atol=1e-5), (
        tag, float(np.max(np.abs(out - ref))))


if __name__ == "__main__":
    key = jax.random.PRNGKey(0)
    k1, k2, k3, k4, k5, k6, k7, k8 = jax.random.split(key, 8)
    lambda_rof, tau = 7.0, 0.05

    # Case 1: lane-aligned width; auto tiling picks >=2 row tiles (halo path).
    M, N = 32, 128
    x = jax.random.normal(k1, (1, M, N), dtype=jnp.float32)
    img_obs = jax.random.normal(k2, (1, M, N), dtype=jnp.float32)
    y = jax.random.normal(k3, (2, M, N), dtype=jnp.float32)
    w = jax.random.uniform(k4, (2, M, N), dtype=jnp.float32)
    ref = _reference(x, y, img_obs, w, lambda_rof, tau)

    out_auto = jax.block_until_ready(
        primal_weighted_update(x, y, img_obs, w, lambda_rof=lambda_rof, tau=tau))
    out_tiled = jax.block_until_ready(
        primal_weighted_update(x, y, img_obs, w, lambda_rof=lambda_rof, tau=tau, row_tile=8))
    _check(out_auto, ref, "auto")
    _check(out_tiled, ref, "row_tile=8")

    # Case 2: ragged width (padded to 128 internally), multi-tile halo + a
    # single-tile (no-halo) run via the row_tile override.
    M2, N2 = 40, 72
    x2 = jax.random.normal(k5, (1, M2, N2), dtype=jnp.float32)
    img_obs2 = jax.random.normal(k6, (1, M2, N2), dtype=jnp.float32)
    y2 = jax.random.normal(k7, (2, M2, N2), dtype=jnp.float32)
    w2 = jax.random.uniform(k8, (2, M2, N2), dtype=jnp.float32)
    ref2 = _reference(x2, y2, img_obs2, w2, lambda_rof, tau)

    out2_auto = jax.block_until_ready(
        primal_weighted_update(x2, y2, img_obs2, w2, lambda_rof=lambda_rof, tau=tau))
    out2_single = jax.block_until_ready(
        primal_weighted_update(x2, y2, img_obs2, w2, lambda_rof=lambda_rof, tau=tau,
                               row_tile=M2))
    _check(out2_auto, ref2, "ragged-auto")
    _check(out2_single, ref2, "ragged-single-tile")

    print("KERNEL_OK")
</pallas_src>

<mosaic_0001>
module attributes {stable_mosaic.version = 11 : i64} {
  func.func @kernel(%arg0: i32, %arg1: memref<1x16x128xf32, #tpu.memory_space<vmem>>, %arg2: memref<1x16x128xf32, #tpu.memory_space<vmem>>, %arg3: memref<2x16x128xf32, #tpu.memory_space<vmem>>, %arg4: memref<2x16x128xf32, #tpu.memory_space<vmem>>, %arg5: memref<1x8x128xf32, #tpu.memory_space<vmem>>, %arg6: memref<1x8x128xf32, #tpu.memory_space<vmem>>, %arg7: memref<1x16x128xf32, #tpu.memory_space<vmem>>) attributes {dimension_semantics = [#tpu.dimension_semantics<parallel>], iteration_bounds = array<i64: 2>, scalar_prefetch = 0 : i64, scratch_operands = 0 : i64, tpu.core_type = #tpu.core_type<tc>, window_params = [{transform_indices = @transform_0, window_bounds = array<i64: 1, 16, 128>}, {transform_indices = @transform_1, window_bounds = array<i64: 1, 16, 128>}, {transform_indices = @transform_2, window_bounds = array<i64: 2, 16, 128>}, {transform_indices = @transform_3, window_bounds = array<i64: 2, 16, 128>}, {transform_indices = @transform_4, window_bounds = array<i64: 1, 8, 128>}, {transform_indices = @transform_5, window_bounds = array<i64: 1, 8, 128>}, {transform_indices = @transform_6, window_bounds = array<i64: 1, 16, 128>}]} {
    %c0 = arith.constant 0 : index
    %c7 = arith.constant 7 : index
    %c0_0 = arith.constant 0 : index
    %0 = vector.load %arg5[%c0, %c7, %c0_0] : memref<1x8x128xf32, #tpu.memory_space<vmem>>, vector<1x1x128xf32>
    %1 = vector.shape_cast %0 : vector<1x1x128xf32> to vector<1x128xf32>
    %c0_1 = arith.constant 0 : index
    %c7_2 = arith.constant 7 : index
    %c0_3 = arith.constant 0 : index
    %2 = vector.load %arg6[%c0_1, %c7_2, %c0_3] : memref<1x8x128xf32, #tpu.memory_space<vmem>>, vector<1x1x128xf32>
    %3 = vector.shape_cast %2 : vector<1x1x128xf32> to vector<1x128xf32>
    %4 = arith.mulf %1, %3 : vector<1x128xf32>
    %c0_i32 = arith.constant 0 : i32
    %5 = arith.cmpi eq, %arg0, %c0_i32 : i32
    %cst = arith.constant 0.000000e+00 : f32
    %6 = vector.broadcast %cst : f32 to vector<1x128xf32>
    %7 = arith.select %5, %6, %4 : vector<1x128xf32>
    %c0_4 = arith.constant 0 : index
    %c0_5 = arith.constant 0 : index
    %c0_6 = arith.constant 0 : index
    %8 = vector.load %arg1[%c0_4, %c0_5, %c0_6] : memref<1x16x128xf32, #tpu.memory_space<vmem>>, vector<1x16x128xf32>
    %9 = vector.shape_cast %8 : vector<1x16x128xf32> to vector<16x128xf32>
    %c0_7 = arith.constant 0 : index
    %c0_8 = arith.constant 0 : index
    %c0_9 = arith.constant 0 : index
    %10 = vector.load %arg2[%c0_7, %c0_8, %c0_9] : memref<1x16x128xf32, #tpu.memory_space<vmem>>, vector<1x16x128xf32>
    %11 = vector.shape_cast %10 : vector<1x16x128xf32> to vector<16x128xf32>
    %c0_10 = arith.constant 0 : index
    %c0_11 = arith.constant 0 : index
    %c0_12 = arith.constant 0 : index
    %12 = vector.load %arg3[%c0_10, %c0_11, %c0_12] : memref<2x16x128xf32, #tpu.memory_space<vmem>>, vector<1x16x128xf32>
    %13 = vector.shape_cast %12 : vector<1x16x128xf32> to vector<16x128xf32>
    %c0_13 = arith.constant 0 : index
    %c0_14 = arith.constant 0 : index
    %c0_15 = arith.constant 0 : index
    %14 = vector.load %arg4[%c0_13, %c0_14, %c0_15] : memref<2x16x128xf32, #tpu.memory_space<vmem>>, vector<1x16x128xf32>
    %15 = vector.shape_cast %14 : vector<1x16x128xf32> to vector<16x128xf32>
    %16 = arith.mulf %13, %15 : vector<16x128xf32>
    %c1 = arith.constant 1 : index
    %c0_16 = arith.constant 0 : index
    %c0_17 = arith.constant 0 : index
    %17 = vector.load %arg3[%c1, %c0_16, %c0_17] : memref<2x16x128xf32, #tpu.memory_space<vmem>>, vector<1x16x128xf32>
    %18 = vector.shape_cast %17 : vector<1x16x128xf32> to vector<16x128xf32>
    %c1_18 = arith.constant 1 : index
    %c0_19 = arith.constant 0 : index
    %c0_20 = arith.constant 0 : index
    %19 = vector.load %arg4[%c1_18, %c0_19, %c0_20] : memref<2x16x128xf32, #tpu.memory_space<vmem>>, vector<1x16x128xf32>
    %20 = vector.shape_cast %19 : vector<1x16x128xf32> to vector<16x128xf32>
    %21 = arith.mulf %18, %20 : vector<16x128xf32>
    %22 = tpu.iota {dimensions = array<i32: 1>} : vector<16x128xi32>
    %23 = tpu.iota {dimensions = array<i32: 0>} : vector<16x128xi32>
    %c127_i32 = arith.constant 127 : i32
    %24 = vector.broadcast %c127_i32 : i32 to vector<16x128xi32>
    %25 = arith.cmpi eq, %22, %24 : vector<16x128xi32>
    %cst_21 = arith.constant 0.000000e+00 : f32
    %26 = vector.broadcast %cst_21 : f32 to vector<16x128xf32>
    %27 = arith.select %25, %26, %16 : vector<16x128xi1>, vector<16x128xf32>
    %c1_i32 = arith.constant 1 : i32
    %28 = tpu.dynamic_rotate %27 by %c1_i32 dim 1 : vector<16x128xf32>, i32 -> vector<16x128xf32>
    %29 = arith.subf %27, %28 : vector<16x128xf32>
    %c1_i32_22 = arith.constant 1 : i32
    %30 = arith.cmpi eq, %arg0, %c1_i32_22 : i32
    %c15_i32 = arith.constant 15 : i32
    %31 = vector.broadcast %c15_i32 : i32 to vector<16x128xi32>
    %32 = arith.cmpi eq, %23, %31 : vector<16x128xi32>
    %33 = vector.broadcast %30 : i1 to vector<16x128xi1>
    %34 = arith.andi %32, %33 : vector<16x128xi1>
    %cst_23 = arith.constant 0.000000e+00 : f32
    %35 = vector.broadcast %cst_23 : f32 to vector<16x128xf32>
    %36 = arith.select %34, %35, %21 : vector<16x128xi1>, vector<16x128xf32>
    %c1_i32_24 = arith.constant 1 : i32
    %37 = tpu.dynamic_rotate %36 by %c1_i32_24 dim 0 : vector<16x128xf32>, i32 -> vector<16x128xf32>
    %c0_i32_25 = arith.constant 0 : i32
    %38 = vector.broadcast %c0_i32_25 : i32 to vector<16x128xi32>
    %39 = arith.cmpi eq, %23, %38 : vector<16x128xi32>
    %40 = vector.shape_cast %7 : vector<1x128xf32> to vector<1x128xf32>
    %41 = vector.broadcast %40 : vector<1x128xf32> to vector<16x128xf32>
    %42 = arith.select %39, %41, %37 : vector<16x128xi1>, vector<16x128xf32>
    %43 = arith.subf %36, %42 : vector<16x128xf32>
    %44 = arith.addf %29, %43 : vector<16x128xf32>
    %cst_26 = arith.constant 5.000000e-02 : f32
    %45 = vector.broadcast %cst_26 : f32 to vector<16x128xf32>
    %46 = arith.mulf %45, %44 : vector<16x128xf32>
    %47 = arith.addf %9, %46 : vector<16x128xf32>
    %cst_27 = arith.constant 3.500000e-01 : f32
    %48 = vector.broadcast %cst_27 : f32 to vector<16x128xf32>
    %49 = arith.mulf %48, %11 : vector<16x128xf32>
    %50 = arith.addf %47, %49 : vector<16x128xf32>
    %cst_28 = arith.constant 0.740740716 : f32
    %51 = vector.broadcast %cst_28 : f32 to vector<16x128xf32>
    %52 = arith.mulf %50, %51 : vector<16x128xf32>
    %c0_29 = arith.constant 0 : index
    %c0_30 = arith.constant 0 : index
    %c0_31 = arith.constant 0 : index
    %53 = vector.load %arg7[%c0_29, %c0_30, %c0_31] : memref<1x16x128xf32, #tpu.memory_space<vmem>>, vector<1x16x128xf32>
    %54 = vector.shape_cast %53 : vector<1x16x128xf32> to vector<16x128xf32>
    %55 = vector.shape_cast %52 : vector<16x128xf32> to vector<1x16x128xf32>
    tpu.vector_store %arg7[%c0_29, %c0_30, %c0_31], %55 {strides = array<i32>} : memref<1x16x128xf32, #tpu.memory_space<vmem>>, vector<1x16x128xf32>,
    return
  }
  func.func @transform_0(%arg0: i32) -> (i32, i32, i32) {
    %c0_i32 = arith.constant 0 : i32
    %c0_i32_0 = arith.constant 0 : i32
    %c0_i32_1 = arith.constant 0 : i32
    return %c0_i32, %arg0, %c0_i32_0 : i32, i32, i32
  }
  func.func @transform_1(%arg0: i32) -> (i32, i32, i32) {
    %c0_i32 = arith.constant 0 : i32
    %c0_i32_0 = arith.constant 0 : i32
    %c0_i32_1 = arith.constant 0 : i32
    return %c0_i32, %arg0, %c0_i32_0 : i32, i32, i32
  }
  func.func @transform_2(%arg0: i32) -> (i32, i32, i32) {
    %c0_i32 = arith.constant 0 : i32
    %c0_i32_0 = arith.constant 0 : i32
    %c0_i32_1 = arith.constant 0 : i32
    return %c0_i32, %arg0, %c0_i32_0 : i32, i32, i32
  }
  func.func @transform_3(%arg0: i32) -> (i32, i32, i32) {
    %c0_i32 = arith.constant 0 : i32
    %c0_i32_0 = arith.constant 0 : i32
    %c0_i32_1 = arith.constant 0 : i32
    return %c0_i32, %arg0, %c0_i32_0 : i32, i32, i32
  }
  func.func @transform_4(%arg0: i32) -> (i32, i32, i32) {
    %c2_i32 = arith.constant 2 : i32
    %0 = arith.muli %arg0, %c2_i32 : i32
    %c1_i32 = arith.constant 1 : i32
    %1 = arith.subi %0, %c1_i32 : i32
    %c0_i32 = arith.constant 0 : i32
    %2 = arith.maxsi %1, %c0_i32 : i32
    %c1_i32_0 = arith.constant 1 : i32
    %c0_i32_1 = arith.constant 0 : i32
    %c0_i32_2 = arith.constant 0 : i32
    return %c1_i32_0, %2, %c0_i32_1 : i32, i32, i32
  }
  func.func @transform_5(%arg0: i32) -> (i32, i32, i32) {
    %c2_i32 = arith.constant 2 : i32
    %0 = arith.muli %arg0, %c2_i32 : i32
    %c1_i32 = arith.constant 1 : i32
    %1 = arith.subi %0, %c1_i32 : i32
    %c0_i32 = arith.constant 0 : i32
    %2 = arith.maxsi %1, %c0_i32 : i32
    %c1_i32_0 = arith.constant 1 : i32
    %c0_i32_1 = arith.constant 0 : i32
    %c0_i32_2 = arith.constant 0 : i32
    return %c1_i32_0, %2, %c0_i32_1 : i32, i32, i32
  }
  func.func @transform_6(%arg0: i32) -> (i32, i32, i32) {
    %c0_i32 = arith.constant 0 : i32
    %c0_i32_0 = arith.constant 0 : i32
    %c0_i32_1 = arith.constant 0 : i32
    return %c0_i32, %arg0, %c0_i32_0 : i32, i32, i32
  }
}

</mosaic_0001>

<llo_original>
// kernel: tpu_custom_call.1
$region0: #{tpu_custom_call.1}
  #allocation0 [shape = 'u32[]', space=smem, size = 0x4, offset = 0x4, fixed_abs, tag = 'smem constant byte address 0x4 - core index']
  #allocation1 [shape = 'u32[144,128]{1,0:T(1,128)}', space=vmem, size = 0x12000, scoped, tag = 'internal scratch']
  #allocation14 [shape = 's32[]', space=sflag, size = 0x4, offset = 0, fixed_abs, tag = 'sflag constant byte address 0x0 - dummy sync flag']
  #allocation16 [shape = 's32[]', space=sflag, size = 0x4, offset = 0, fixed_abs, tag = 'sflag constant byte address 0x0 - dummy sync flag']
  %s0 = inlined_call_operand.hbm [shape: f32[1,32,128], index: 0, kind: input, shape index: {}]
  %s1 = inlined_call_operand.hbm [shape: f32[1,32,128], index: 1, kind: input, shape index: {}]
  %s2 = inlined_call_operand.hbm [shape: f32[2,32,128], index: 2, kind: input, shape index: {}]
  %s3 = inlined_call_operand.hbm [shape: f32[2,32,128], index: 3, kind: input, shape index: {}]
  %s4 = inlined_call_operand.hbm [shape: f32[2,32,128], index: 4, kind: input, shape index: {}]
  %s5 = inlined_call_operand.hbm [shape: f32[2,32,128], index: 5, kind: input, shape index: {}]
  %s6 = inlined_call_operand.hbm [shape: f32[1,32,128], index: 6, kind: output, shape index: {}]
  %s7 = sld [smem:[#allocation0]]
  $region81: #{tpu_custom_call.1} parent=0
    _
  %s9 = ssub.s32 1, %s7
  %s10 = scalar_select 0, %s9, %s7
  $region1: #{tpu_custom_call.1} parent=0
    #allocation2 [shape = 'u8[16384]{0}', space=vmem, size = 0x4000, scoped, tag = 'input window, operand 0']
    #allocation3 [shape = 's32[2]{0}', space=sflag, size = 0x8, scoped, tag = 'scoped memory for tpu_custom_call.1']
    #allocation4 [shape = 's32[2]{0}', space=sflag, size = 0x8, scoped, tag = 'scoped memory for tpu_custom_call.1']
    #allocation5 [shape = 'u8[16384]{0}', space=vmem, size = 0x4000, scoped, tag = 'input window, operand 1']
    #allocation6 [shape = 's32[2]{0}', space=sflag, size = 0x8, scoped, tag = 'scoped memory for tpu_custom_call.1']
    #allocation7 [shape = 'u8[32768]{0}', space=vmem, size = 0x8000, scoped, tag = 'input window, operand 2']
    #allocation8 [shape = 'u8[32768]{0}', space=vmem, size = 0x8000, scoped, tag = 'input window, operand 3']
    #allocation9 [shape = 's32[2]{0}', space=sflag, size = 0x8, scoped, tag = 'scoped memory for tpu_custom_call.1']
    #allocation10 [shape = 'u8[8192]{0}', space=vmem, size = 0x2000, scoped, tag = 'input window, operand 4']
    #allocation11 [shape = 'u8[8192]{0}', space=vmem, size = 0x2000, scoped, tag = 'input window, operand 5']
    #allocation12 [shape = 's32[2]{0}', space=sflag, size = 0x8, scoped, tag = 'scoped memory for tpu_custom_call.1']
    #allocation13 [shape = 'u8[16384]{0}', space=vmem, size = 0x4000, scoped, tag = 'output window, operand 0']
    %11 = vsyncpa [#allocation3], 0
    %s12 = scalar_lea.sflag [#allocation3], 1
    %13 = vsyncpa %s12, 0
    %14 = vsyncpa [#allocation6], 0
    %s15 = scalar_lea.sflag [#allocation6], 1
    %16 = vsyncpa %s15, 0
    %17 = vsyncpa [#allocation9], 0
    %s18 = scalar_lea.sflag [#allocation9], 1
    %19 = vsyncpa %s18, 0
    %20 = vsyncpa [#allocation12], 0
    %s21 = scalar_lea.sflag [#allocation12], 1
    %22 = vsyncpa %s21, 0
    %23 = vsyncpa [#allocation4], 0
    %s24 = scalar_lea.sflag [#allocation4], 1
    %25 = vsyncpa %s24, 0
    loop: start=0, step=1, limit=4
    $region2: #{tpu_custom_call.1} parent=1 // loop_pre_header
      _
    $region3: #{tpu_custom_call.1} parent=1 // loop_header
      %s27 = sphi 0, %s31
      %p28 = scmp.ge.s32.totalorder %s27, 4
      %s37 = sphi 0, %s39
      %s40 = sphi 0, %s37
      %s41 = sphi 0, %s40
      %s57 = sphi 0, %s41
      %s63 = sphi 0, %s65
      %s66 = sphi 0, %s63
      %s67 = sphi 0, %s66
      %s83 = sphi 0, %s67
      %s89 = sphi 0, %s91
      %s92 = sphi 0, %s89
      %s93 = sphi 0, %s92
      %s109 = sphi 0, %s93
      %s115 = sphi 0, %s117
      %s118 = sphi 0, %s115
      %s119 = sphi 0, %s118
      %s135 = sphi 0, %s119
      %s149 = sphi 0, %s151
      %s152 = sphi 0, %s149
      %s153 = sphi 0, %s152
      %s169 = sphi 0, %s153
      %s183 = sphi 0, %s185
      %s186 = sphi 0, %s183
      %s187 = sphi 0, %s186
      %s203 = sphi 0, %s187
      %s209 = sphi 0, %s211
      %s212 = sphi 0, %s209
      %s213 = sphi 0, %s212
      %s229 = sphi 0, %s213
    $region4: #{tpu_custom_call.1} parent=1 // loop_header_branch
      %30 = sbr.rel (%p28) target = $region8
    $region5: #{tpu_custom_call.1} parent=1 // loop_body
      %s32 = ssub.s32 %s27, 1
      %s33 = ssub.s32 %s27, 2
      %s34 = sadd.s32 %s27, 1
      %s35 = ssub.s32 %s27, %s34
      %p36 = scmp.eq.s32.totalorder %s35, 0
      %s38 = sadd.s32 %s37, 1
      %s39 = scalar_select %p36, %s37, %s38
      %p42 = pneg %p36
      %p43 = scmp.eq.s32.totalorder %s27, 1
      %p44 = por %p42, %p43
      %p45 = scmp.ne.s32.totalorder %s37, %s40
      %p46 = scmp.eq.s32.totalorder %s27, 0
      %p47 = por %p45, %p46
      %p48 = scmp.ne.s32.totalorder %s37, %s40
      %p49 = scmp.eq.s32.totalorder %s32, 1
      %p50 = por %p48, %p49
      %p51 = scmp.ne.s32.totalorder %s40, %s41
      %p52 = scmp.eq.s32.totalorder %s32, 0
      %p53 = por %p51, %p52
      %p54 = scmp.ne.s32.totalorder %s40, %s41
      %p55 = scmp.eq.s32.totalorder %s33, 1
      %p56 = por %p54, %p55
      %p58 = scmp.ne.s32.totalorder %s41, %s57
      %p59 = scmp.eq.s32.totalorder %s33, 0
      %p60 = por %p58, %p59
      %s61 = ssub.s32 %s27, %s34
      %p62 = scmp.eq.s32.totalorder %s61, 0
      %s64 = sadd.s32 %s63, 1
      %s65 = scalar_select %p62, %s63, %s64
      %p68 = pneg %p62
      %p69 = scmp.eq.s32.totalorder %s27, 1
      %p70 = por %p68, %p69
      %p71 = scmp.ne.s32.totalorder %s63, %s66
      %p72 = scmp.eq.s32.totalorder %s27, 0
      %p73 = por %p71, %p72
      %p74 = scmp.ne.s32.totalorder %s63, %s66
      %p75 = scmp.eq.s32.totalorder %s32, 1
      %p76 = por %p74, %p75
      %p77 = scmp.ne.s32.totalorder %s66, %s67
      %p78 = scmp.eq.s32.totalorder %s32, 0
      %p79 = por %p77, %p78
      %p80 = scmp.ne.s32.totalorder %s66, %s67
      %p81 = scmp.eq.s32.totalorder %s33, 1
      %p82 = por %p80, %p81
      %p84 = scmp.ne.s32.totalorder %s67, %s83
      %p85 = scmp.eq.s32.totalorder %s33, 0
      %p86 = por %p84, %p85
      %s87 = ssub.s32 %s27, %s34
      %p88 = scmp.eq.s32.totalorder %s87, 0
      %s90 = sadd.s32 %s89, 1
      %s91 = scalar_select %p88, %s89, %s90
      %p94 = pneg %p88
      %p95 = scmp.eq.s32.totalorder %s27, 1
      %p96 = por %p94, %p95
      %p97 = scmp.ne.s32.totalorder %s89, %s92
      %p98 = scmp.eq.s32.totalorder %s27, 0
      %p99 = por %p97, %p98
      %p100 = scmp.ne.s32.totalorder %s89, %s92
      %p101 = scmp.eq.s32.totalorder %s32, 1
      %p102 = por %p100, %p101
      %p103 = scmp.ne.s32.totalorder %s92, %s93
      %p104 = scmp.eq.s32.totalorder %s32, 0
      %p105 = por %p103, %p104
      %p106 = scmp.ne.s32.totalorder %s92, %s93
      %p107 = scmp.eq.s32.totalorder %s33, 1
      %p108 = por %p106, %p107
      %p110 = scmp.ne.s32.totalorder %s93, %s109
      %p111 = scmp.eq.s32.totalorder %s33, 0
      %p112 = por %p110, %p111
      %s113 = ssub.s32 %s27, %s34
      %p114 = scmp.eq.s32.totalorder %s113, 0
      %s116 = sadd.s32 %s115, 1
      %s117 = scalar_select %p114, %s115, %s116
      %p120 = pneg %p114
      %p121 = scmp.eq.s32.totalorder %s27, 1
      %p122 = por %p120, %p121
      %p123 = scmp.ne.s32.totalorder %s115, %s118
      %p124 = scmp.eq.s32.totalorder %s27, 0
      %p125 = por %p123, %p124
      %p126 = scmp.ne.s32.totalorder %s115, %s118
      %p127 = scmp.eq.s32.totalorder %s32, 1
      %p128 = por %p126, %p127
      %p129 = scmp.ne.s32.totalorder %s118, %s119
      %p130 = scmp.eq.s32.totalorder %s32, 0
      %p131 = por %p129, %p130
      %p132 = scmp.ne.s32.totalorder %s118, %s119
      %p133 = scmp.eq.s32.totalorder %s33, 1
      %p134 = por %p132, %p133
      %p136 = scmp.ne.s32.totalorder %s119, %s135
      %p137 = scmp.eq.s32.totalorder %s33, 0
      %p138 = por %p136, %p137
      %s139 = smul.u32 %s27, 2
      %s140 = ssub.s32 %s139, 1
      %p141 = scmp.gt.s32.totalorder %s140, 0
      %s142 = scalar_select %p141, %s140, 0
      %s143 = smul.u32 %s34, 2
      %s144 = ssub.s32 %s143, 1
      %p145 = scmp.gt.s32.totalorder %s144, 0
      %s146 = scalar_select %p145, %s144, 0
      %s147 = ssub.s32 %s142, %s146
      %p148 = scmp.eq.s32.totalorder %s147, 0
      %s150 = sadd.s32 %s149, 1
      %s151 = scalar_select %p148, %s149, %s150
      %p154 = pneg %p148
      %p155 = scmp.eq.s32.totalorder %s27, 1
      %p156 = por %p154, %p155
      %p157 = scmp.ne.s32.totalorder %s149, %s152
      %p158 = scmp.eq.s32.totalorder %s27, 0
      %p159 = por %p157, %p158
      %p160 = scmp.ne.s32.totalorder %s149, %s152
      %p161 = scmp.eq.s32.totalorder %s32, 1
      %p162 = por %p160, %p161
      %p163 = scmp.ne.s32.totalorder %s152, %s153
      %p164 = scmp.eq.s32.totalorder %s32, 0
      %p165 = por %p163, %p164
      %p166 = scmp.ne.s32.totalorder %s152, %s153
      %p167 = scmp.eq.s32.totalorder %s33, 1
      %p168 = por %p166, %p167
      %p170 = scmp.ne.s32.totalorder %s153, %s169
      %p171 = scmp.eq.s32.totalorder %s33, 0
      %p172 = por %p170, %p171
      %s173 = smul.u32 %s27, 2
      %s174 = ssub.s32 %s173, 1
      %p175 = scmp.gt.s32.totalorder %s174, 0
      %s176 = scalar_select %p175, %s174, 0
      %s177 = smul.u32 %s34, 2
      %s178 = ssub.s32 %s177, 1
      %p179 = scmp.gt.s32.totalorder %s178, 0
      %s180 = scalar_select %p179, %s178, 0
      %s181 = ssub.s32 %s176, %s180
      %p182 = scmp.eq.s32.totalorder %s181, 0
      %s184 = sadd.s32 %s183, 1
      %s185 = scalar_select %p182, %s183, %s184
      %p188 = pneg %p182
      %p189 = scmp.eq.s32.totalorder %s27, 1
      %p190 = por %p188, %p189
      %p191 = scmp.ne.s32.totalorder %s183, %s186
      %p192 = scmp.eq.s32.totalorder %s27, 0
      %p193 = por %p191, %p192
      %p194 = scmp.ne.s32.totalorder %s183, %s186
      %p195 = scmp.eq.s32.totalorder %s32, 1
      %p196 = por %p194, %p195
      %p197 = scmp.ne.s32.totalorder %s186, %s187
      %p198 = scmp.eq.s32.totalorder %s32, 0
      %p199 = por %p197, %p198
      %p200 = scmp.ne.s32.totalorder %s186, %s187
      %p201 = scmp.eq.s32.totalorder %s33, 1
      %p202 = por %p200, %p201
      %p204 = scmp.ne.s32.totalorder %s187, %s203
      %p205 = scmp.eq.s32.totalorder %s33, 0
      %p206 = por %p204, %p205
      %s207 = ssub.s32 %s27, %s34
      %p208 = scmp.eq.s32.totalorder %s207, 0
      %s210 = sadd.s32 %s209, 1
      %s211 = scalar_select %p208, %s209, %s210
      %p214 = pneg %p208
      %p215 = scmp.eq.s32.totalorder %s27, 1
      %p216 = por %p214, %p215
      %p217 = scmp.ne.s32.totalorder %s209, %s212
      %p218 = scmp.eq.s32.totalorder %s27, 0
      %p219 = por %p217, %p218
      %p220 = scmp.ne.s32.totalorder %s209, %s212
      %p221 = scmp.eq.s32.totalorder %s32, 1
      %p222 = por %p220, %p221
      %p223 = scmp.ne.s32.totalorder %s212, %s213
      %p224 = scmp.eq.s32.totalorder %s32, 0
      %p225 = por %p223, %p224
      %p226 = scmp.ne.s32.totalorder %s212, %s213
      %p227 = scmp.eq.s32.totalorder %s33, 1
      %p228 = por %p226, %p227
      %p230 = scmp.ne.s32.totalorder %s213, %s229
      %p231 = scmp.eq.s32.totalorder %s33, 0
      %p232 = por %p230, %p231
      %p233 = scmp.le.s32.totalorder 1, %s27
      %p234 = scmp.lt.s32.totalorder %s27, 3
      %p235 = pnand %p233, %p234
      %p236 = pneg %p235
      // Predicated region
      $region9: #{tpu_custom_call.1} parent=5 // pred_check
        _
      $region10: #{tpu_custom_call.1} parent=5 // pred_check_branch
        %238 = sbr.rel (%p235) target = $region12
      $region11: #{tpu_custom_call.1} parent=5 // pred_region
        %s239 = ssub.s32 %s27, 1
      $region12: #{tpu_custom_call.1} parent=5 // pred_fallthru
        _
      %p240 = scmp.lt.s32.totalorder %s27, 2
      // Predicated region
      $region13: #{tpu_custom_call.1} parent=5 // pred_check
        %p241 = pneg %p240
      $region14: #{tpu_custom_call.1} parent=5 // pred_check_branch
        %243 = sbr.rel (%p241) target = $region16
      $region15: #{tpu_custom_call.1} parent=5 // pred_region
        // Predicated region
        $region17: #{tpu_custom_call.1} parent=15 // pred_check
          %p244 = pneg %p47
        $region18: #{tpu_custom_call.1} parent=15 // pred_check_branch
          %246 = sbr.rel (%p244) target = $region20
        $region19: #{tpu_custom_call.1} parent=15 // pred_region
          %s247 = sand.u32 %s37, 1
          %s248 = scalar_lea.sflag [#allocation3], %s247
          %s249 = sand.u32 %s37, 1
          %s250 = smul.addr %s249, 16
          %s251 = scalar_lea.vmem [#allocation2], %s250
          %s252 = smul.u32 2, %s27
          %s254 = ssub.s32 256, 256
          %255 = vsyncadd %s248, %s254
          %s256 = smul.addr %s252, 128
          %s257 = scalar_lea.hbm %s0, %s256
          %s258 = sshll.u32 %s251, 4
          %s259 = int_to_ptr.vmem [resolvable:$true] %s258
          %264 = dma.hbm_to_vmem [thread:$0]  %s257, 256, %s259, %s248, 128, 128, 8
        $region20: #{tpu_custom_call.1} parent=15 // pred_fallthru
          _
        // Predicated region
        $region21: #{tpu_custom_call.1} parent=15 // pred_check
          %p265 = pneg %p73
        $region22: #{tpu_custom_call.1} parent=15 // pred_check_branch
          %267 = sbr.rel (%p265) target = $region24
        $region23: #{tpu_custom_call.1} parent=15 // pred_region
          %s268 = sand.u32 %s27, 1
          %s269 = scalar_lea.sflag [#allocation6], %s268
          %s270 = sand.u32 %s63, 1
          %s271 = smul.addr %s270, 16
          %s272 = scalar_lea.vmem [#allocation5], %s271
          %s273 = smul.u32 2, %s27
          %s275 = ssub.s32 256, 256
          %276 = vsyncadd %s269, %s275
          %s277 = smul.addr %s273, 128
          %s278 = scalar_lea.hbm %s1, %s277
          %s279 = sshll.u32 %s272, 4
          %s280 = int_to_ptr.vmem [resolvable:$true] %s279
          %285 = dma.hbm_to_vmem [thread:$0]  %s278, 256, %s280, %s269, 128, 128, 8
        $region24: #{tpu_custom_call.1} parent=15 // pred_fallthru
          _
        // Predicated region
        $region25: #{tpu_custom_call.1} parent=15 // pred_check
          %p286 = pneg %p99
        $region26: #{tpu_custom_call.1} parent=15 // pred_check_branch
          %288 = sbr.rel (%p286) target = $region28
        $region27: #{tpu_custom_call.1} parent=15 // pred_region
          #allocation15 [shape = 'u32[6]{0}', space=smem, size = 0x18, scoped, tag = 'DMA stride descriptor']
          %s289 = sand.u32 %s27, 1
          %s290 = scalar_lea.sflag [#allocation6], %s289
          %s291 = sand.u32 %s89, 1
          %s292 = smul.addr %s291, 32
          %s293 = scalar_lea.vmem [#allocation7], %s292
          %s294 = smul.u32 2, %s27
          %s296 = ssub.s32 512, 512
          %297 = vsyncadd %s290, %s296
          %s298 = smul.addr %s294, 128
          %s299 = scalar_lea.hbm %s2, %s298
          %s301 = sshll.u32 1, 14
          %s302 = sxor.u32 4294967295, %s301
          %s304 = sld [smem:[#allocation0]]
          %s305 = sadd.s32 2, %s304
          %s307 = sshll.u32 7, 26
          %s308 = sxor.u32 4294967295, %s307
          %s309 = sand.u32 0, %s308
          %s310 = sshll.u32 %s305, 26
          %s311 = sor.u32 %s309, %s310
          %s312 = sshll.u32 %s293, 4
          %s313 = int_to_ptr.vmem [resolvable:$true] %s312
          %319 = sst [smem:[#allocation15]] 512
          %s320 = scalar_lea.smem [#allocation15], 1
          %321 = sst [smem:[%s320]] 256
          %s322 = scalar_lea.smem [#allocation15], 2
          %323 = sst [smem:[%s322]] 2
          %s324 = scalar_lea.smem [#allocation15], 3
          %325 = sst [smem:[%s324]] 128
          %s326 = scalar_lea.smem [#allocation15], 4
          %327 = sst [smem:[%s326]] 128
          %s328 = scalar_lea.smem [#allocation15], 5
          %329 = sst [smem:[%s328]] 8
          %331 = dma.general %s299, 512, %s313, %s290, [#allocation14], [#allocation15], %s311, 0
        $region28: #{tpu_custom_call.1} parent=15 // pred_fallthru
          _
        // Predicated region
        $region29: #{tpu_custom_call.1} parent=15 // pred_check
          %p332 = pneg %p125
        $region30: #{tpu_custom_call.1} parent=15 // pred_check_branch
          %334 = sbr.rel (%p332) target = $region32
        $region31: #{tpu_custom_call.1} parent=15 // pred_region
          #allocation17 [shape = 'u32[6]{0}', space=smem, size = 0x18, scoped, tag = 'DMA stride descriptor']
          %s335 = sand.u32 %s27, 1
          %s336 = scalar_lea.sflag [#allocation9], %s335
          %s337 = sand.u32 %s115, 1
          %s338 = smul.addr %s337, 32
          %s339 = scalar_lea.vmem [#allocation8], %s338
          %s340 = smul.u32 2, %s27
          %s342 = ssub.s32 512, 512
          %343 = vsyncadd %s336, %s342
          %s344 = smul.addr %s340, 128
          %s345 = scalar_lea.hbm %s3, %s344
          %s347 = sshll.u32 1, 14
          %s348 = sxor.u32 4294967295, %s347
          %s350 = sld [smem:[#allocation0]]
          %s351 = sadd.s32 2, %s350
          %s353 = sshll.u32 7, 26
          %s354 = sxor.u32 4294967295, %s353
          %s355 = sand.u32 0, %s354
          %s356 = sshll.u32 %s351, 26
          %s357 = sor.u32 %s355, %s356
          %s358 = sshll.u32 %s339, 4
          %s359 = int_to_ptr.vmem [resolvable:$true] %s358
          %365 = sst [smem:[#allocation17]] 512
          %s366 = scalar_lea.smem [#allocation17], 1
          %367 = sst [smem:[%s366]] 256
          %s368 = scalar_lea.smem [#allocation17], 2
          %369 = sst [smem:[%s368]] 2
          %s370 = scalar_lea.smem [#allocation17], 3
          %371 = sst [smem:[%s370]] 128
          %s372 = scalar_lea.smem [#allocation17], 4
          %373 = sst [smem:[%s372]] 128
          %s374 = scalar_lea.smem [#allocation17], 5
          %375 = sst [smem:[%s374]] 8
          %377 = dma.general %s345, 512, %s359, %s336, [#allocation16], [#allocation17], %s357, 0
        $region32: #{tpu_custom_call.1} parent=15 // pred_fallthru
          _
        // Predicated region
        $region33: #{tpu_custom_call.1} parent=15 // pred_check
          %p378 = pneg %p159
        $region34: #{tpu_custom_call.1} parent=15 // pred_check_branch
          %380 = sbr.rel (%p378) target = $region36
        $region35: #{tpu_custom_call.1} parent=15 // pred_region
          %s381 = sand.u32 %s27, 1
          %s382 = scalar_lea.sflag [#allocation9], %s381
          %s383 = sand.u32 %s149, 1
          %s384 = smul.addr %s383, 8
          %s385 = scalar_lea.vmem [#allocation10], %s384
          %s386 = smul.u32 %s27, 2
          %s387 = ssub.s32 %s386, 1
          %p388 = scmp.gt.s32.totalorder %s387, 0
          %s389 = scalar_select %p388, %s387, 0
          %s391 = ssub.s32 128, 128
          %392 = vsyncadd %s382, %s391
          %s393 = sadd.s32 %s389, 4
          %s394 = smul.addr %s393, 128
          %s395 = scalar_lea.hbm %s4, %s394
          %s397 = sshll.u32 %s385, 4
          %s398 = int_to_ptr.vmem [resolvable:$true] %s397
          %400 = dma.hbm_to_vmem [thread:$0]  %s395, 128, %s398, %s382
        $region36: #{tpu_custom_call.1} parent=15 // pred_fallthru
          _
        // Predicated region
        $region37: #{tpu_custom_call.1} parent=15 // pred_check
          %p401 = pneg %p193
        $region38: #{tpu_custom_call.1} parent=15 // pred_check_branch
          %403 = sbr.rel (%p401) target = $region40
        $region39: #{tpu_custom_call.1} parent=15 // pred_region
          %s404 = sand.u32 %s183, 1
          %s405 = scalar_lea.sflag [#allocation12], %s404
          %s406 = sand.u32 %s183, 1
          %s407 = smul.addr %s406, 8
          %s408 = scalar_lea.vmem [#allocation11], %s407
          %s409 = smul.u32 %s27, 2
          %s410 = ssub.s32 %s409, 1
          %p411 = scmp.gt.s32.totalorder %s410, 0
          %s412 = scalar_select %p411, %s410, 0
          %s414 = ssub.s32 128, 128
          %415 = vsyncadd %s405, %s414
          %s416 = sadd.s32 %s412, 4
          %s417 = smul.addr %s416, 128
          %s418 = scalar_lea.hbm %s5, %s417
          %s420 = sshll.u32 %s408, 4
          %s421 = int_to_ptr.vmem [resolvable:$true] %s420
          %423 = dma.hbm_to_vmem [thread:$0]  %s418, 128, %s421, %s405
        $region40: #{tpu_custom_call.1} parent=15 // pred_fallthru
          _
      $region16: #{tpu_custom_call.1} parent=5 // pred_fallthru
        _
      %p424 = scmp.le.s32.totalorder 1, %s27
      %p425 = scmp.lt.s32.totalorder %s27, 3
      %p426 = pnand %p424, %p425
      %p427 = pneg %p426
      // Predicated region
      $region41: #{tpu_custom_call.1} parent=5 // pred_check
        _
      $region42: #{tpu_custom_call.1} parent=5 // pred_check_branch
        %429 = sbr.rel (%p426) target = $region44
      $region43: #{tpu_custom_call.1} parent=5 // pred_region
        %s430 = ssub.s32 %s27, 1
        %s431 = sand.u32 %s40, 1
        %s432 = scalar_lea.sflag [#allocation3], %s431
        %s433 = sand.u32 %s40, 1
        %s434 = smul.addr %s433, 16
        %s435 = scalar_lea.vmem [#allocation2], %s434
        // Predicated region
        $region45: #{tpu_custom_call.1} parent=43 // pred_check
          %p436 = pneg %p53
        $region46: #{tpu_custom_call.1} parent=43 // pred_check_branch
          %438 = sbr.rel (%p436) target = $region48
        $region47: #{tpu_custom_call.1} parent=43 // pred_region
          %439 = dma.done %s432, 256
        $region48: #{tpu_custom_call.1} parent=43 // pred_fallthru
          _
        %s440 = sand.u32 %s32, 1
        %s441 = scalar_lea.sflag [#allocation6], %s440
        %s442 = sand.u32 %s66, 1
        %s443 = smul.addr %s442, 16
        %s444 = scalar_lea.vmem [#allocation5], %s443
        // Predicated region
        $region49: #{tpu_custom_call.1} parent=43 // pred_check
          %p445 = pneg %p79
        $region50: #{tpu_custom_call.1} parent=43 // pred_check_branch
          %447 = sbr.rel (%p445) target = $region52
        $region51: #{tpu_custom_call.1} parent=43 // pred_region
          %448 = dma.done %s441, 256
        $region52: #{tpu_custom_call.1} parent=43 // pred_fallthru
          _
        %s449 = sand.u32 %s32, 1
        %s450 = scalar_lea.sflag [#allocation6], %s449
        %s451 = sand.u32 %s92, 1
        %s452 = smul.addr %s451, 32
        %s453 = scalar_lea.vmem [#allocation7], %s452
        // Predicated region
        $region53: #{tpu_custom_call.1} parent=43 // pred_check
          %p454 = pneg %p105
        $region54: #{tpu_custom_call.1} parent=43 // pred_check_branch
          %456 = sbr.rel (%p454) target = $region56
        $region55: #{tpu_custom_call.1} parent=43 // pred_region
          %457 = dma.done %s450, 512
        $region56: #{tpu_custom_call.1} parent=43 // pred_fallthru
          _
        %s458 = sand.u32 %s32, 1
        %s459 = scalar_lea.sflag [#allocation9], %s458
        %s460 = sand.u32 %s118, 1
        %s461 = smul.addr %s460, 32
        %s462 = scalar_lea.vmem [#allocation8], %s461
        // Predicated region
        $region57: #{tpu_custom_call.1} parent=43 // pred_check
          %p463 = pneg %p131
        $region58: #{tpu_custom_call.1} parent=43 // pred_check_branch
          %465 = sbr.rel (%p463) target = $region60
        $region59: #{tpu_custom_call.1} parent=43 // pred_region
          %466 = dma.done %s459, 512
        $region60: #{tpu_custom_call.1} parent=43 // pred_fallthru
          _
        %s467 = sand.u32 %s32, 1
        %s468 = scalar_lea.sflag [#allocation9], %s467
        %s469 = sand.u32 %s152, 1
        %s470 = smul.addr %s469, 8
        %s471 = scalar_lea.vmem [#allocation10], %s470
        // Predicated region
        $region61: #{tpu_custom_call.1} parent=43 // pred_check
          %p472 = pneg %p165
        $region62: #{tpu_custom_call.1} parent=43 // pred_check_branch
          %474 = sbr.rel (%p472) target = $region64
        $region63: #{tpu_custom_call.1} parent=43 // pred_region
          %475 = dma.done %s468, 128
        $region64: #{tpu_custom_call.1} parent=43 // pred_fallthru
          _
        %s476 = sand.u32 %s186, 1
        %s477 = scalar_lea.sflag [#allocation12], %s476
        %s478 = sand.u32 %s186, 1
        %s479 = smul.addr %s478, 8
        %s480 = scalar_lea.vmem [#allocation11], %s479
        // Predicated region
        $region65: #{tpu_custom_call.1} parent=43 // pred_check
          %p481 = pneg %p199
        $region66: #{tpu_custom_call.1} parent=43 // pred_check_branch
          %483 = sbr.rel (%p481) target = $region68
        $region67: #{tpu_custom_call.1} parent=43 // pred_region
          %484 = dma.done %s477, 128
        $region68: #{tpu_custom_call.1} parent=43 // pred_fallthru
          _
        %s485 = sand.u32 %s40, 1
        %s486 = scalar_lea.sflag [#allocation3], %s485
        %s487 = sand.u32 %s40, 1
        %s488 = smul.addr %s487, 16
        %s489 = scalar_lea.vmem [#allocation2], %s488
        %p490 = pneg %p53
        %p491 = pneg %p50
        %s492 = sand.u32 %s32, 1
        %s493 = scalar_lea.sflag [#allocation6], %s492
        %s494 = sand.u32 %s66, 1
        %s495 = smul.addr %s494, 16
        %s496 = scalar_lea.vmem [#allocation5], %s495
        %p497 = pneg %p79
        %p498 = pneg %p76
        %s499 = sand.u32 %s32, 1
        %s500 = scalar_lea.sflag [#allocation6], %s499
        %s501 = sand.u32 %s92, 1
        %s502 = smul.addr %s501, 32
        %s503 = scalar_lea.vmem [#allocation7], %s502
        %p504 = pneg %p105
        %p505 = pneg %p102
        %s506 = sand.u32 %s32, 1
        %s507 = scalar_lea.sflag [#allocation9], %s506
        %s508 = sand.u32 %s118, 1
        %s509 = smul.addr %s508, 32
        %s510 = scalar_lea.vmem [#allocation8], %s509
        %p511 = pneg %p131
        %p512 = pneg %p128
        %s513 = sand.u32 %s32, 1
        %s514 = scalar_lea.sflag [#allocation9], %s513
        %s515 = sand.u32 %s152, 1
        %s516 = smul.addr %s515, 8
        %s517 = scalar_lea.vmem [#allocation10], %s516
        %p518 = pneg %p165
        %p519 = pneg %p162
        %s520 = sand.u32 %s186, 1
        %s521 = scalar_lea.sflag [#allocation12], %s520
        %s522 = sand.u32 %s186, 1
        %s523 = smul.addr %s522, 8
        %s524 = scalar_lea.vmem [#allocation11], %s523
        %p525 = pneg %p199
        %p526 = pneg %p196
        %p527 = pneg %p225
        %p528 = pneg %p222
        %s529 = sand.u32 %s212, 1
        %s530 = scalar_lea.sflag [#allocation4], %s529
        %s531 = sand.u32 %s212, 1
        %s532 = smul.addr %s531, 16
        %s533 = scalar_lea.vmem [#allocation13], %s532
        %s534 = smul.u32 2, %s32
        %s535 = smul.u32 2, %s32
        %s536 = smul.u32 2, %s32
        %s537 = smul.u32 2, %s32
        %s538 = smul.u32 %s32, 2
        %s539 = ssub.s32 %s538, 1
        %p540 = scmp.gt.s32.totalorder %s539, 0
        %s541 = scalar_select %p540, %s539, 0
        %s542 = smul.u32 %s32, 2
        %s543 = ssub.s32 %s542, 1
        %p544 = scmp.gt.s32.totalorder %s543, 0
        %s545 = scalar_select %p544, %s543, 0
        %s546 = smul.u32 2, %s32
        %v547 = vld [vmem:[%s471 + $0x7] sm:$0x1]
        %v548 = vld [vmem:[%s480 + $0x7] sm:$0x1]
        %v549 = vmul.f32 %v547, %v548
        %p550 = scmp.eq.s32.totalorder %s32, 0
        %s551 = scalar_select %p550, 1, 0
        %v552 = vstv %s551
        %vm553 = vcmp.eq.s32.totalorder %v552, 1
        %v554 = vsel %vm553, 0.0, %v549
        %v555 = vld [vmem:[%s435] sm:$0xff]
        %v556 = vld [vmem:[%s435 + $0x8] sm:$0xff]
        %v557 = vld [vmem:[%s444] sm:$0xff]
        %v558 = vld [vmem:[%s444 + $0x8] sm:$0xff]
        %v559 = vld [vmem:[%s453] sm:$0xff]
        %v560 = vld [vmem:[%s453 + $0x8] sm:$0xff]
        %v561 = vld [vmem:[%s462] sm:$0xff]
        %v562 = vld [vmem:[%s462 + $0x8] sm:$0xff]
        %v563 = vmul.f32 %v559, %v561
        %v564 = vmul.f32 %v560, %v562
        %s565 = scalar_lea.vmem %s453, 16 [#allocation7]
        %v566 = vld [vmem:[%s565] sm:$0xff]
        %v567 = vld [vmem:[%s565 + $0x8] sm:$0xff]
        %s568 = scalar_lea.vmem %s462, 16 [#allocation8]
        %v569 = vld [vmem:[%s568] sm:$0xff]
        %v570 = vld [vmem:[%s568 + $0x8] sm:$0xff]
        %v571 = vmul.f32 %v566, %v569
        %v572 = vmul.f32 %v567, %v570
        %v573 = vlaneseq
        %v574 = vand.u32 %v573, 127
        %v575 = vlaneseq
        %v576 = vshrl.u32 %v575, 7
        %v577 = vadd.s32 %v576, 8
        %vm578 = vcmp.eq.s32.totalorder %v574, 127
        %v579 = vsel %vm578, 0.0, %v563
        %v580 = vsel %vm578, 0.0, %v564
        %581 = vrot.lane.b32.xlu0 %v579, 1
        %v582 = vpop.permute.xlu0 %581
        %583 = vrot.lane.b32.xlu0 %v580, 1
        %v584 = vpop.permute.xlu0 %583
        %v585 = vsub.f32 %v579, %v582
        %v586 = vsub.f32 %v580, %v584
        %p587 = scmp.eq.s32.totalorder %s32, 1
        %vm588 = vcmp.eq.s32.totalorder %v576, 15
        %vm589 = vcmp.eq.s32.totalorder %v577, 15
        %s590 = scalar_select %p587, 1, 0
        %v591 = vstv %s590
        %vm592 = vcmp.eq.s32.totalorder %v591, 1
        %vm593 = vmand %vm588, %vm592
        %vm594 = vmand %vm589, %vm592
        %v595 = vsel %vm593, 0.0, %v571
        %v596 = vsel %vm594, 0.0, %v572
        %v597 = vrot.slane %v595, 7
        %v598 = vrot.slane %v596, 7
        %vm599 = vcmp.lt.s32.totalorder %v576, 1
        %v600 = vsel %vm599, %v597, %v598
        %v601 = vsel %vm599, %v598, %v597
        %vm602 = vcmp.eq.s32.totalorder %v576, 0
        %vm603 = vcmp.eq.s32.totalorder %v577, 0
        %v604 = vlaneseq
        %v605 = vshrl.u32 %v604, 7
        %v606 = vsub.s32 0, %v605
        %v607 = vrot.slane %v554, %v606
        %v608 = vsel %vm602, %v607, %v601
        %v609 = vsel %vm603, %v607, %v600
        %v610 = vsub.f32 %v595, %v608
        %v611 = vsub.f32 %v596, %v609
        %v612 = vadd.f32 %v585, %v610
        %v613 = vadd.f32 %v586, %v611
        %v614 = vmul.f32 %v612, 0.05
        %v615 = vmul.f32 %v613, 0.05
        %v616 = vadd.f32 %v555, %v614
        %v617 = vadd.f32 %v556, %v615
        %v618 = vmul.f32 %v557, 0.35
        %v619 = vmul.f32 %v558, 0.35
        %v620 = vadd.f32 %v616, %v618
        %v621 = vadd.f32 %v617, %v619
        %v622 = vmul.f32 %v620, 0.7407407
        %v623 = vmul.f32 %v621, 0.7407407
        %624 = vst [vmem:[%s533] sm:$0xff] %v622
        %625 = vst [vmem:[%s533 + $0x8] sm:$0xff] %v623
        %s626 = sand.u32 %s212, 1
        %s627 = scalar_lea.sflag [#allocation4], %s626
        %s628 = sand.u32 %s212, 1
        %s629 = smul.addr %s628, 16
        %s630 = scalar_lea.vmem [#allocation13], %s629
        // Predicated region
        $region69: #{tpu_custom_call.1} parent=43 // pred_check
          %p631 = pneg %p222
        $region70: #{tpu_custom_call.1} parent=43 // pred_check_branch
          %633 = sbr.rel (%p631) target = $region72
        $region71: #{tpu_custom_call.1} parent=43 // pred_region
          %s634 = smul.u32 2, %s32
          %s636 = ssub.s32 256, 256
          %637 = vsyncadd %s627, %s636
          %s638 = smul.addr %s634, 128
          %s639 = scalar_lea.hbm %s6, %s638
          %s640 = sshll.u32 %s630, 4
          %s641 = int_to_ptr.vmem [resolvable:$true] %s640
          %646 = dma.vmem_to_hbm [thread:$0]  %s641, 256, %s639, %s627, 128, 128, 8
        $region72: #{tpu_custom_call.1} parent=43 // pred_fallthru
          _
      $region44: #{tpu_custom_call.1} parent=5 // pred_fallthru
        _
      %p647 = scmp.le.s32.totalorder 2, %s27
      // Predicated region
      $region73: #{tpu_custom_call.1} parent=5 // pred_check
        %p648 = pneg %p647
      $region74: #{tpu_custom_call.1} parent=5 // pred_check_branch
        %650 = sbr.rel (%p648) target = $region76
      $region75: #{tpu_custom_call.1} parent=5 // pred_region
        %s651 = ssub.s32 %s27, 2
        // Predicated region
        $region77: #{tpu_custom_call.1} parent=75 // pred_check
          %p652 = pneg %p228
        $region78: #{tpu_custom_call.1} parent=75 // pred_check_branch
          %654 = sbr.rel (%p652) target = $region80
        $region79: #{tpu_custom_call.1} parent=75 // pred_region
          %s655 = sand.u32 %s213, 1
          %s656 = scalar_lea.sflag [#allocation4], %s655
          %s657 = sand.u32 %s213, 1
          %s658 = smul.addr %s657, 16
          %s659 = scalar_lea.vmem [#allocation13], %s658
          %660 = dma.done %s656, 256
        $region80: #{tpu_custom_call.1} parent=75 // pred_fallthru
          _
      $region76: #{tpu_custom_call.1} parent=5 // pred_fallthru
        _
    $region6: #{tpu_custom_call.1} parent=1 // loop_footer
      %s31 = sadd.s32 1, %s27
    $region7: #{tpu_custom_call.1} parent=1 // loop_footer_branch
      %26 = sbr.rel target = $region3
    $region8: #{tpu_custom_call.1} parent=1 // loop_exit
      _
    %661 = vsyncpa [#allocation3], 1
    %s662 = scalar_lea.sflag [#allocation3], 1
    %663 = vsyncpa %s662, 1
    %664 = vsyncpa [#allocation6], 1
    %s665 = scalar_lea.sflag [#allocation6], 1
    %666 = vsyncpa %s665, 1
    %667 = vsyncpa [#allocation9], 1
    %s668 = scalar_lea.sflag [#allocation9], 1
    %669 = vsyncpa %s668, 1
    %670 = vsyncpa [#allocation12], 1
    %s671 = scalar_lea.sflag [#allocation12], 1
    %672 = vsyncpa %s671, 1
    %673 = vsyncpa [#allocation4], 1
    %s674 = scalar_lea.sflag [#allocation4], 1
    %675 = vsyncpa %s674, 1

</llo_original>
